<compile_context>
chip_gen: v7x
topology: tpu7x:2x2x1
jax: 0.10.0
libtpu: 0.0.40
codegen_flags: <defaults>
</compile_context>

<pallas_src>
import jax
import jax.numpy as jnp
from jax.experimental import pallas as pl
from jax.experimental.pallas import tpu as pltpu

LANES = 256                    # lane dim (multiple of 128); padding granularity <= 255 elems
BLOCK_ROWS = 4096              # sublane dim cap (multiple of 8); 4096*256*4B = 4 MiB per tile
_PALLAS_MIN_ELEMS = 16384      # below this, the fused-XLA multiply-add is strictly faster


def _scale_shift_kernel(w_ref, b_ref, x_ref, o_ref):
    # w_ref, b_ref: (1, 1) f32 scalars in SMEM; x_ref / o_ref: (block_rows, LANES)
    # VMEM tiles.  Scalar reads broadcast across the vreg on the VPU.
    o_ref[...] = x_ref[...] * w_ref[0, 0] + b_ref[0, 0]


def _choose_block_rows(rows: int) -> int:
    """Tile sublane size: <=4 MiB tiles, >=2 grid blocks when possible so the
    'parallel' grid axis load-balances across v7x's two TensorCores."""
    if rows < 16:
        return rows                       # single full-extent block
    half = -(-rows // 2)                  # cdiv(rows, 2)
    half = -(-half // 8) * 8              # round up to a multiple of 8
    return min(BLOCK_ROWS, half)


def _scale_shift_pallas(slab, scale, shift):
    rows = slab.shape[0]
    block_rows = _choose_block_rows(rows)
    num_blocks = pl.cdiv(rows, block_rows)   # partial last block handled by Pallas masking
    return pl.pallas_call(
        _scale_shift_kernel,
        out_shape=jax.ShapeDtypeStruct(slab.shape, slab.dtype),
        grid=(num_blocks,),
        in_specs=[
            pl.BlockSpec(memory_space=pltpu.MemorySpace.SMEM),      # w scalar
            pl.BlockSpec(memory_space=pltpu.MemorySpace.SMEM),      # b scalar
            pl.BlockSpec((block_rows, LANES), lambda i: (i, 0)),    # x tile
        ],
        out_specs=pl.BlockSpec((block_rows, LANES), lambda i: (i, 0)),
        compiler_params=pltpu.CompilerParams(
            dimension_semantics=("parallel",),
            # 4 MiB tiles, double-buffered in + out = 16 MiB: above v5e's
            # 16 MiB scoped default, comfortably under physical VMEM everywhere.
            vmem_limit_bytes=32 * 1024 * 1024,
        ),
        cost_estimate=pl.CostEstimate(
            flops=2 * slab.size,
            transcendentals=0,
            bytes_accessed=2 * slab.size * slab.dtype.itemsize,  # read x + write y
        ),
    )(scale, shift, slab)


def linear_1x1(x, w, b):
    """Forward of nn.Linear(1, 1): x (N, 1) f32, w (1, 1), b (1,) -> (N, 1)."""
    n = x.shape[0]
    scale = w.reshape(1, 1).astype(x.dtype)
    shift = b.reshape(1, 1).astype(x.dtype)

    # Tiny inputs: a kernel launch is pure overhead; let XLA fuse the multiply-add.
    if n < _PALLAS_MIN_ELEMS:
        return x * scale[0, 0] + shift[0, 0]

    flat = x.reshape(-1)
    n_main = (n // LANES) * LANES

    if n_main == n:
        # Aligned: contiguous reshape to the lane-dense slab is a free bitcast.
        slab = flat.reshape(n // LANES, LANES)
        out = _scale_shift_pallas(slab, scale, shift)
        return out.reshape(n, 1)

    # Unaligned: Pallas on the 256-aligned prefix, plain XLA on the <=255-elem tail.
    main = flat[:n_main].reshape(n_main // LANES, LANES)
    out_main = _scale_shift_pallas(main, scale, shift).reshape(-1)
    out_tail = flat[n_main:] * scale[0, 0] + shift[0, 0]
    return jnp.concatenate([out_main, out_tail]).reshape(n, 1)


if __name__ == "__main__":
    key = jax.random.PRNGKey(0)
    kw, kb, kx1, kx2, kx3 = jax.random.split(key, 5)

    # nn.Linear(1, 1) parameters (PyTorch default init range U(-1, 1) for fan_in=1).
    w = jax.random.uniform(kw, (1, 1), jnp.float32, minval=-1.0, maxval=1.0)
    b = jax.random.uniform(kb, (1,), jnp.float32, minval=-1.0, maxval=1.0)

    # 1) Aligned batch (N % 256 == 0): pure Pallas path, multi-block grid, no pad/slice.
    n_aligned = 1024 * LANES                       # 262,144 elements (~1 MiB)
    x_aligned = jax.random.normal(kx1, (n_aligned, 1), jnp.float32)
    out_aligned = jax.block_until_ready(linear_1x1(x_aligned, w, b))
    ref_aligned = x_aligned @ w.T + b
    assert out_aligned.shape == (n_aligned, 1)
    assert jnp.allclose(out_aligned, ref_aligned, atol=1e-5), "aligned pallas path mismatch"

    # 2) Unaligned batch: Pallas prefix + XLA tail.
    n_tail = n_aligned + 123
    x_tail = jax.random.normal(kx2, (n_tail, 1), jnp.float32)
    out_tail = jax.block_until_ready(linear_1x1(x_tail, w, b))
    ref_tail = x_tail @ w.T + b
    assert out_tail.shape == (n_tail, 1)
    assert jnp.allclose(out_tail, ref_tail, atol=1e-5), "unaligned pallas path mismatch"

    # 3) Tiny batch (typical toy usage of this module): fused-XLA fallback.
    x_small = jax.random.normal(kx3, (8, 1), jnp.float32)
    out_small = jax.block_until_ready(linear_1x1(x_small, w, b))
    ref_small = x_small @ w.T + b
    assert out_small.shape == (8, 1)
    assert jnp.allclose(out_small, ref_small, atol=1e-6), "fallback path mismatch"

    print("KERNEL_OK")
</pallas_src>

<mosaic_0001>
module attributes {stable_mosaic.version = 11 : i64} {
  func.func @_scale_shift_kernel(%arg0: i32, %arg1: memref<1x1xf32, #tpu.memory_space<smem>>, %arg2: memref<1x1xf32, #tpu.memory_space<smem>>, %arg3: memref<512x256xf32, #tpu.memory_space<vmem>>, %arg4: memref<512x256xf32, #tpu.memory_space<vmem>>) attributes {dimension_semantics = [#tpu.dimension_semantics<parallel>], iteration_bounds = array<i64: 2>, scalar_prefetch = 0 : i64, scratch_operands = 0 : i64, tpu.core_type = #tpu.core_type<tc>, window_params = [{transform_indices = @transform_0, window_bounds = array<i64: 1, 1>}, {transform_indices = @transform_1, window_bounds = array<i64: 1, 1>}, {transform_indices = @transform_2, window_bounds = array<i64: 512, 256>}, {transform_indices = @transform_3, window_bounds = array<i64: 512, 256>}]} {
    %c0 = arith.constant 0 : index
    %c0_0 = arith.constant 0 : index
    %0 = vector.load %arg3[%c0, %c0_0] : memref<512x256xf32, #tpu.memory_space<vmem>>, vector<512x256xf32>
    %c0_1 = arith.constant 0 : index
    %c0_2 = arith.constant 0 : index
    %1 = memref.load %arg1[%c0_1, %c0_2] : memref<1x1xf32, #tpu.memory_space<smem>>
    %2 = vector.broadcast %1 : f32 to vector<512x256xf32>
    %3 = arith.mulf %0, %2 : vector<512x256xf32>
    %c0_3 = arith.constant 0 : index
    %c0_4 = arith.constant 0 : index
    %4 = memref.load %arg2[%c0_3, %c0_4] : memref<1x1xf32, #tpu.memory_space<smem>>
    %5 = vector.broadcast %4 : f32 to vector<512x256xf32>
    %6 = arith.addf %3, %5 : vector<512x256xf32>
    %c0_5 = arith.constant 0 : index
    %c0_6 = arith.constant 0 : index
    %7 = vector.load %arg4[%c0_5, %c0_6] : memref<512x256xf32, #tpu.memory_space<vmem>>, vector<512x256xf32>
    tpu.vector_store %arg4[%c0_5, %c0_6], %6 {strides = array<i32>} : memref<512x256xf32, #tpu.memory_space<vmem>>, vector<512x256xf32>,
    return
  }
  func.func @transform_0(%arg0: i32) -> (i32, i32) {
    %c0_i32 = arith.constant 0 : i32
    %c0_i32_0 = arith.constant 0 : i32
    %c0_i32_1 = arith.constant 0 : i32
    return %c0_i32, %c0_i32_0 : i32, i32
  }
  func.func @transform_1(%arg0: i32) -> (i32, i32) {
    %c0_i32 = arith.constant 0 : i32
    %c0_i32_0 = arith.constant 0 : i32
    %c0_i32_1 = arith.constant 0 : i32
    return %c0_i32, %c0_i32_0 : i32, i32
  }
  func.func @transform_2(%arg0: i32) -> (i32, i32) {
    %c0_i32 = arith.constant 0 : i32
    %c0_i32_0 = arith.constant 0 : i32
    return %arg0, %c0_i32 : i32, i32
  }
  func.func @transform_3(%arg0: i32) -> (i32, i32) {
    %c0_i32 = arith.constant 0 : i32
    %c0_i32_0 = arith.constant 0 : i32
    return %arg0, %c0_i32 : i32, i32
  }
}

</mosaic_0001>

<llo_original>
// kernel: tpu_custom_call.1
$region0: #{tpu_custom_call.1}
  #allocation0 [shape = 'u32[]', space=smem, size = 0x4, offset = 0x4, fixed_abs, tag = 'smem constant byte address 0x4 - core index']
  #allocation1 [shape = 'u32[144,128]{1,0:T(1,128)}', space=vmem, size = 0x12000, scoped, tag = 'internal scratch']
  #allocation2 [shape = 'f32[1,1]{1,0:T(1,128)S(6)}', space=smem, size = 0x200, scoped, tag = 'scoped memory for tpu_custom_call.1']
  #allocation3 [shape = 'f32[1,1]{1,0:T(1,128)S(6)}', space=smem, size = 0x200, scoped, tag = 'scoped memory for tpu_custom_call.1']
  %s0 = inlined_call_operand.<no memory space> [shape: f32[1,1], index: 0, kind: input, shape index: {}]
  %s1 = inlined_call_operand.<no memory space> [shape: f32[1,1], index: 1, kind: input, shape index: {}]
  %s2 = inlined_call_operand.hbm [shape: f32[1024,256], index: 2, kind: input, shape index: {}]
  %s3 = inlined_call_operand.hbm [shape: f32[1024,256], index: 3, kind: output, shape index: {}]
  %s4 = sld [smem:[#allocation0]]
  $region49: #{tpu_custom_call.1} parent=0
    _
  %s6 = ssub.s32 1, %s4
  %s7 = scalar_select 0, %s6, %s4
  %8 = sst [smem:[#allocation2]] %s0
  %9 = sst [smem:[#allocation3]] %s1
  $region1: #{tpu_custom_call.1} parent=0
    #allocation4 [shape = 'u8[1048576]{0}', space=vmem, size = 0x100000, scoped, tag = 'input window, operand 2']
    #allocation5 [shape = 's32[2]{0}', space=sflag, size = 0x8, scoped, tag = 'scoped memory for tpu_custom_call.1']
    #allocation6 [shape = 's32[2]{0}', space=sflag, size = 0x8, scoped, tag = 'scoped memory for tpu_custom_call.1']
    #allocation7 [shape = 'u8[1048576]{0}', space=vmem, size = 0x100000, scoped, tag = 'output window, operand 0']
    %10 = vsyncpa [#allocation5], 0
    %s11 = scalar_lea.sflag [#allocation5], 1
    %12 = vsyncpa %s11, 0
    %13 = vsyncpa [#allocation6], 0
    %s14 = scalar_lea.sflag [#allocation6], 1
    %15 = vsyncpa %s14, 0
    loop: start=0, step=1, limit=4
    $region2: #{tpu_custom_call.1} parent=1 // loop_pre_header
      _
    $region3: #{tpu_custom_call.1} parent=1 // loop_header
      %s17 = sphi 0, %s21
      %p18 = scmp.ge.s32.totalorder %s17, 4
      %s25 = sphi 0, %s25
      %s27 = sphi 0, %s25
      %s28 = sphi 0, %s27
      %s42 = sphi 0, %s28
      %s46 = sphi 0, %s46
      %s48 = sphi 0, %s46
      %s49 = sphi 0, %s48
      %s63 = sphi 0, %s49
      %s69 = sphi 0, %s71
      %s72 = sphi 0, %s69
      %s73 = sphi 0, %s72
      %s89 = sphi 0, %s73
      %s95 = sphi 0, %s97
      %s98 = sphi 0, %s95
      %s99 = sphi 0, %s98
      %s115 = sphi 0, %s99
    $region4: #{tpu_custom_call.1} parent=1 // loop_header_branch
      %20 = sbr.rel (%p18) target = $region8
    $region5: #{tpu_custom_call.1} parent=1 // loop_body
      %s22 = ssub.s32 %s17, 1
      %s23 = ssub.s32 %s17, 2
      %s24 = sadd.s32 %s17, 1
      %s26 = sadd.s32 %s25, 1
      %p29 = scmp.eq.s32.totalorder %s17, 1
      %p30 = scmp.ne.s32.totalorder %s25, %s27
      %p31 = scmp.eq.s32.totalorder %s17, 0
      %p32 = por %p30, %p31
      %p33 = scmp.ne.s32.totalorder %s25, %s27
      %p34 = scmp.eq.s32.totalorder %s22, 1
      %p35 = por %p33, %p34
      %p36 = scmp.ne.s32.totalorder %s27, %s28
      %p37 = scmp.eq.s32.totalorder %s22, 0
      %p38 = por %p36, %p37
      %p39 = scmp.ne.s32.totalorder %s27, %s28
      %p40 = scmp.eq.s32.totalorder %s23, 1
      %p41 = por %p39, %p40
      %p43 = scmp.ne.s32.totalorder %s28, %s42
      %p44 = scmp.eq.s32.totalorder %s23, 0
      %p45 = por %p43, %p44
      %s47 = sadd.s32 %s46, 1
      %p50 = scmp.eq.s32.totalorder %s17, 1
      %p51 = scmp.ne.s32.totalorder %s46, %s48
      %p52 = scmp.eq.s32.totalorder %s17, 0
      %p53 = por %p51, %p52
      %p54 = scmp.ne.s32.totalorder %s46, %s48
      %p55 = scmp.eq.s32.totalorder %s22, 1
      %p56 = por %p54, %p55
      %p57 = scmp.ne.s32.totalorder %s48, %s49
      %p58 = scmp.eq.s32.totalorder %s22, 0
      %p59 = por %p57, %p58
      %p60 = scmp.ne.s32.totalorder %s48, %s49
      %p61 = scmp.eq.s32.totalorder %s23, 1
      %p62 = por %p60, %p61
      %p64 = scmp.ne.s32.totalorder %s49, %s63
      %p65 = scmp.eq.s32.totalorder %s23, 0
      %p66 = por %p64, %p65
      %s67 = ssub.s32 %s17, %s24
      %p68 = scmp.eq.s32.totalorder %s67, 0
      %s70 = sadd.s32 %s69, 1
      %s71 = scalar_select %p68, %s69, %s70
      %p74 = pneg %p68
      %p75 = scmp.eq.s32.totalorder %s17, 1
      %p76 = por %p74, %p75
      %p77 = scmp.ne.s32.totalorder %s69, %s72
      %p78 = scmp.eq.s32.totalorder %s17, 0
      %p79 = por %p77, %p78
      %p80 = scmp.ne.s32.totalorder %s69, %s72
      %p81 = scmp.eq.s32.totalorder %s22, 1
      %p82 = por %p80, %p81
      %p83 = scmp.ne.s32.totalorder %s72, %s73
      %p84 = scmp.eq.s32.totalorder %s22, 0
      %p85 = por %p83, %p84
      %p86 = scmp.ne.s32.totalorder %s72, %s73
      %p87 = scmp.eq.s32.totalorder %s23, 1
      %p88 = por %p86, %p87
      %p90 = scmp.ne.s32.totalorder %s73, %s89
      %p91 = scmp.eq.s32.totalorder %s23, 0
      %p92 = por %p90, %p91
      %s93 = ssub.s32 %s17, %s24
      %p94 = scmp.eq.s32.totalorder %s93, 0
      %s96 = sadd.s32 %s95, 1
      %s97 = scalar_select %p94, %s95, %s96
      %p100 = pneg %p94
      %p101 = scmp.eq.s32.totalorder %s17, 1
      %p102 = por %p100, %p101
      %p103 = scmp.ne.s32.totalorder %s95, %s98
      %p104 = scmp.eq.s32.totalorder %s17, 0
      %p105 = por %p103, %p104
      %p106 = scmp.ne.s32.totalorder %s95, %s98
      %p107 = scmp.eq.s32.totalorder %s22, 1
      %p108 = por %p106, %p107
      %p109 = scmp.ne.s32.totalorder %s98, %s99
      %p110 = scmp.eq.s32.totalorder %s22, 0
      %p111 = por %p109, %p110
      %p112 = scmp.ne.s32.totalorder %s98, %s99
      %p113 = scmp.eq.s32.totalorder %s23, 1
      %p114 = por %p112, %p113
      %p116 = scmp.ne.s32.totalorder %s99, %s115
      %p117 = scmp.eq.s32.totalorder %s23, 0
      %p118 = por %p116, %p117
      %p119 = scmp.le.s32.totalorder 1, %s17
      %p120 = scmp.lt.s32.totalorder %s17, 3
      %p121 = pnand %p119, %p120
      %p122 = pneg %p121
      // Predicated region
      $region9: #{tpu_custom_call.1} parent=5 // pred_check
        _
      $region10: #{tpu_custom_call.1} parent=5 // pred_check_branch
        %124 = sbr.rel (%p121) target = $region12
      $region11: #{tpu_custom_call.1} parent=5 // pred_region
        %s125 = ssub.s32 %s17, 1
        // Predicated region
        $region13: #{tpu_custom_call.1} parent=11 // pred_check
          %p126 = pneg %p38
        $region14: #{tpu_custom_call.1} parent=11 // pred_check_branch
          %128 = sbr.rel (%p126) target = $region16
        $region15: #{tpu_custom_call.1} parent=11 // pred_region
          _
        $region16: #{tpu_custom_call.1} parent=11 // pred_fallthru
          _
        // Predicated region
        $region17: #{tpu_custom_call.1} parent=11 // pred_check
          %p129 = pneg %p59
        $region18: #{tpu_custom_call.1} parent=11 // pred_check_branch
          %131 = sbr.rel (%p129) target = $region20
        $region19: #{tpu_custom_call.1} parent=11 // pred_region
          _
        $region20: #{tpu_custom_call.1} parent=11 // pred_fallthru
          _
      $region12: #{tpu_custom_call.1} parent=5 // pred_fallthru
        _
      %p132 = scmp.lt.s32.totalorder %s17, 2
      // Predicated region
      $region21: #{tpu_custom_call.1} parent=5 // pred_check
        %p133 = pneg %p132
      $region22: #{tpu_custom_call.1} parent=5 // pred_check_branch
        %135 = sbr.rel (%p133) target = $region24
      $region23: #{tpu_custom_call.1} parent=5 // pred_region
        // Predicated region
        $region25: #{tpu_custom_call.1} parent=23 // pred_check
          %p136 = pneg %p79
        $region26: #{tpu_custom_call.1} parent=23 // pred_check_branch
          %138 = sbr.rel (%p136) target = $region28
        $region27: #{tpu_custom_call.1} parent=23 // pred_region
          %s139 = sand.u32 %s69, 1
          %s140 = scalar_lea.sflag [#allocation5], %s139
          %s141 = sand.u32 %s69, 1
          %s142 = smul.addr %s141, 1024
          %s143 = scalar_lea.vmem [#allocation4], %s142
          %s144 = smul.u32 64, %s17
          %s146 = ssub.s32 16384, 16384
          %147 = vsyncadd %s140, %s146
          %s148 = smul.addr %s144, 2
          %s149 = smul.addr %s148, 128
          %s150 = scalar_lea.hbm %s2, %s149
          %s151 = sshll.u32 %s143, 4
          %s152 = int_to_ptr.vmem [resolvable:$true] %s151
          %157 = dma.hbm_to_vmem [thread:$0]  %s150, 16384, %s152, %s140, 256, 256, 16
        $region28: #{tpu_custom_call.1} parent=23 // pred_fallthru
          _
      $region24: #{tpu_custom_call.1} parent=5 // pred_fallthru
        _
      %p158 = scmp.le.s32.totalorder 1, %s17
      %p159 = scmp.lt.s32.totalorder %s17, 3
      %p160 = pnand %p158, %p159
      %p161 = pneg %p160
      // Predicated region
      $region29: #{tpu_custom_call.1} parent=5 // pred_check
        _
      $region30: #{tpu_custom_call.1} parent=5 // pred_check_branch
        %163 = sbr.rel (%p160) target = $region32
      $region31: #{tpu_custom_call.1} parent=5 // pred_region
        %s164 = ssub.s32 %s17, 1
        %s165 = sand.u32 %s72, 1
        %s166 = scalar_lea.sflag [#allocation5], %s165
        %s167 = sand.u32 %s72, 1
        %s168 = smul.addr %s167, 1024
        %s169 = scalar_lea.vmem [#allocation4], %s168
        // Predicated region
        $region33: #{tpu_custom_call.1} parent=31 // pred_check
          %p170 = pneg %p85
        $region34: #{tpu_custom_call.1} parent=31 // pred_check_branch
          %172 = sbr.rel (%p170) target = $region36
        $region35: #{tpu_custom_call.1} parent=31 // pred_region
          %173 = dma.done %s166, 16384
        $region36: #{tpu_custom_call.1} parent=31 // pred_fallthru
          _
        %p174 = pneg %p38
        %p175 = pneg %p35
        %p176 = pneg %p59
        %p177 = pneg %p56
        %s178 = sand.u32 %s72, 1
        %s179 = scalar_lea.sflag [#allocation5], %s178
        %s180 = sand.u32 %s72, 1
        %s181 = smul.addr %s180, 1024
        %s182 = scalar_lea.vmem [#allocation4], %s181
        %p183 = pneg %p85
        %p184 = pneg %p82
        %p185 = pneg %p111
        %p186 = pneg %p108
        %s187 = sand.u32 %s98, 1
        %s188 = scalar_lea.sflag [#allocation6], %s187
        %s189 = sand.u32 %s98, 1
        %s190 = smul.addr %s189, 1024
        %s191 = scalar_lea.vmem [#allocation7], %s190
        %s192 = smul.u32 64, %s22
        %s193 = smul.u32 64, %s22
        %v194 = vld [vmem:[%s169] sm:$0xff]
        %v195 = vld [vmem:[%s169 + $0x8] sm:$0xff]
        %v196 = vld [vmem:[%s169 + $0x10] sm:$0xff]
        %v197 = vld [vmem:[%s169 + $0x18] sm:$0xff]
        %v198 = vld [vmem:[%s169 + $0x20] sm:$0xff]
        %v199 = vld [vmem:[%s169 + $0x28] sm:$0xff]
        %v200 = vld [vmem:[%s169 + $0x30] sm:$0xff]
        %v201 = vld [vmem:[%s169 + $0x38] sm:$0xff]
        %v202 = vld [vmem:[%s169 + $0x40] sm:$0xff]
        %v203 = vld [vmem:[%s169 + $0x48] sm:$0xff]
        %v204 = vld [vmem:[%s169 + $0x50] sm:$0xff]
        %v205 = vld [vmem:[%s169 + $0x58] sm:$0xff]
        %v206 = vld [vmem:[%s169 + $0x60] sm:$0xff]
        %v207 = vld [vmem:[%s169 + $0x68] sm:$0xff]
        %v208 = vld [vmem:[%s169 + $0x70] sm:$0xff]
        %v209 = vld [vmem:[%s169 + $0x78] sm:$0xff]
        %v210 = vld [vmem:[%s169 + $0x80] sm:$0xff]
        %v211 = vld [vmem:[%s169 + $0x88] sm:$0xff]
        %v212 = vld [vmem:[%s169 + $0x90] sm:$0xff]
        %v213 = vld [vmem:[%s169 + $0x98] sm:$0xff]
        %v214 = vld [vmem:[%s169 + $0xa0] sm:$0xff]
        %v215 = vld [vmem:[%s169 + $0xa8] sm:$0xff]
        %v216 = vld [vmem:[%s169 + $0xb0] sm:$0xff]
        %v217 = vld [vmem:[%s169 + $0xb8] sm:$0xff]
        %v218 = vld [vmem:[%s169 + $0xc0] sm:$0xff]
        %v219 = vld [vmem:[%s169 + $0xc8] sm:$0xff]
        %v220 = vld [vmem:[%s169 + $0xd0] sm:$0xff]
        %v221 = vld [vmem:[%s169 + $0xd8] sm:$0xff]
        %v222 = vld [vmem:[%s169 + $0xe0] sm:$0xff]
        %v223 = vld [vmem:[%s169 + $0xe8] sm:$0xff]
        %v224 = vld [vmem:[%s169 + $0xf0] sm:$0xff]
        %v225 = vld [vmem:[%s169 + $0xf8] sm:$0xff]
        %v226 = vld [vmem:[%s169 + $0x100] sm:$0xff]
        %v227 = vld [vmem:[%s169 + $0x108] sm:$0xff]
        %v228 = vld [vmem:[%s169 + $0x110] sm:$0xff]
        %v229 = vld [vmem:[%s169 + $0x118] sm:$0xff]
        %v230 = vld [vmem:[%s169 + $0x120] sm:$0xff]
        %v231 = vld [vmem:[%s169 + $0x128] sm:$0xff]
        %v232 = vld [vmem:[%s169 + $0x130] sm:$0xff]
        %v233 = vld [vmem:[%s169 + $0x138] sm:$0xff]
        %v234 = vld [vmem:[%s169 + $0x140] sm:$0xff]
        %v235 = vld [vmem:[%s169 + $0x148] sm:$0xff]
        %v236 = vld [vmem:[%s169 + $0x150] sm:$0xff]
        %v237 = vld [vmem:[%s169 + $0x158] sm:$0xff]
        %v238 = vld [vmem:[%s169 + $0x160] sm:$0xff]
        %v239 = vld [vmem:[%s169 + $0x168] sm:$0xff]
        %v240 = vld [vmem:[%s169 + $0x170] sm:$0xff]
        %v241 = vld [vmem:[%s169 + $0x178] sm:$0xff]
        %v242 = vld [vmem:[%s169 + $0x180] sm:$0xff]
        %v243 = vld [vmem:[%s169 + $0x188] sm:$0xff]
        %v244 = vld [vmem:[%s169 + $0x190] sm:$0xff]
        %v245 = vld [vmem:[%s169 + $0x198] sm:$0xff]
        %v246 = vld [vmem:[%s169 + $0x1a0] sm:$0xff]
        %v247 = vld [vmem:[%s169 + $0x1a8] sm:$0xff]
        %v248 = vld [vmem:[%s169 + $0x1b0] sm:$0xff]
        %v249 = vld [vmem:[%s169 + $0x1b8] sm:$0xff]
        %v250 = vld [vmem:[%s169 + $0x1c0] sm:$0xff]
        %v251 = vld [vmem:[%s169 + $0x1c8] sm:$0xff]
        %v252 = vld [vmem:[%s169 + $0x1d0] sm:$0xff]
        %v253 = vld [vmem:[%s169 + $0x1d8] sm:$0xff]
        %v254 = vld [vmem:[%s169 + $0x1e0] sm:$0xff]
        %v255 = vld [vmem:[%s169 + $0x1e8] sm:$0xff]
        %v256 = vld [vmem:[%s169 + $0x1f0] sm:$0xff]
        %v257 = vld [vmem:[%s169 + $0x1f8] sm:$0xff]
        %v258 = vld [vmem:[%s169 + $0x200] sm:$0xff]
        %v259 = vld [vmem:[%s169 + $0x208] sm:$0xff]
        %v260 = vld [vmem:[%s169 + $0x210] sm:$0xff]
        %v261 = vld [vmem:[%s169 + $0x218] sm:$0xff]
        %v262 = vld [vmem:[%s169 + $0x220] sm:$0xff]
        %v263 = vld [vmem:[%s169 + $0x228] sm:$0xff]
        %v264 = vld [vmem:[%s169 + $0x230] sm:$0xff]
        %v265 = vld [vmem:[%s169 + $0x238] sm:$0xff]
        %v266 = vld [vmem:[%s169 + $0x240] sm:$0xff]
        %v267 = vld [vmem:[%s169 + $0x248] sm:$0xff]
        %v268 = vld [vmem:[%s169 + $0x250] sm:$0xff]
        %v269 = vld [vmem:[%s169 + $0x258] sm:$0xff]
        %v270 = vld [vmem:[%s169 + $0x260] sm:$0xff]
        %v271 = vld [vmem:[%s169 + $0x268] sm:$0xff]
        %v272 = vld [vmem:[%s169 + $0x270] sm:$0xff]
        %v273 = vld [vmem:[%s169 + $0x278] sm:$0xff]
        %v274 = vld [vmem:[%s169 + $0x280] sm:$0xff]
        %v275 = vld [vmem:[%s169 + $0x288] sm:$0xff]
        %v276 = vld [vmem:[%s169 + $0x290] sm:$0xff]
        %v277 = vld [vmem:[%s169 + $0x298] sm:$0xff]
        %v278 = vld [vmem:[%s169 + $0x2a0] sm:$0xff]
        %v279 = vld [vmem:[%s169 + $0x2a8] sm:$0xff]
        %v280 = vld [vmem:[%s169 + $0x2b0] sm:$0xff]
        %v281 = vld [vmem:[%s169 + $0x2b8] sm:$0xff]
        %v282 = vld [vmem:[%s169 + $0x2c0] sm:$0xff]
        %v283 = vld [vmem:[%s169 + $0x2c8] sm:$0xff]
        %v284 = vld [vmem:[%s169 + $0x2d0] sm:$0xff]
        %v285 = vld [vmem:[%s169 + $0x2d8] sm:$0xff]
        %v286 = vld [vmem:[%s169 + $0x2e0] sm:$0xff]
        %v287 = vld [vmem:[%s169 + $0x2e8] sm:$0xff]
        %v288 = vld [vmem:[%s169 + $0x2f0] sm:$0xff]
        %v289 = vld [vmem:[%s169 + $0x2f8] sm:$0xff]
        %v290 = vld [vmem:[%s169 + $0x300] sm:$0xff]
        %v291 = vld [vmem:[%s169 + $0x308] sm:$0xff]
        %v292 = vld [vmem:[%s169 + $0x310] sm:$0xff]
        %v293 = vld [vmem:[%s169 + $0x318] sm:$0xff]
        %v294 = vld [vmem:[%s169 + $0x320] sm:$0xff]
        %v295 = vld [vmem:[%s169 + $0x328] sm:$0xff]
        %v296 = vld [vmem:[%s169 + $0x330] sm:$0xff]
        %v297 = vld [vmem:[%s169 + $0x338] sm:$0xff]
        %v298 = vld [vmem:[%s169 + $0x340] sm:$0xff]
        %v299 = vld [vmem:[%s169 + $0x348] sm:$0xff]
        %v300 = vld [vmem:[%s169 + $0x350] sm:$0xff]
        %v301 = vld [vmem:[%s169 + $0x358] sm:$0xff]
        %v302 = vld [vmem:[%s169 + $0x360] sm:$0xff]
        %v303 = vld [vmem:[%s169 + $0x368] sm:$0xff]
        %v304 = vld [vmem:[%s169 + $0x370] sm:$0xff]
        %v305 = vld [vmem:[%s169 + $0x378] sm:$0xff]
        %v306 = vld [vmem:[%s169 + $0x380] sm:$0xff]
        %v307 = vld [vmem:[%s169 + $0x388] sm:$0xff]
        %v308 = vld [vmem:[%s169 + $0x390] sm:$0xff]
        %v309 = vld [vmem:[%s169 + $0x398] sm:$0xff]
        %v310 = vld [vmem:[%s169 + $0x3a0] sm:$0xff]
        %v311 = vld [vmem:[%s169 + $0x3a8] sm:$0xff]
        %v312 = vld [vmem:[%s169 + $0x3b0] sm:$0xff]
        %v313 = vld [vmem:[%s169 + $0x3b8] sm:$0xff]
        %v314 = vld [vmem:[%s169 + $0x3c0] sm:$0xff]
        %v315 = vld [vmem:[%s169 + $0x3c8] sm:$0xff]
        %v316 = vld [vmem:[%s169 + $0x3d0] sm:$0xff]
        %v317 = vld [vmem:[%s169 + $0x3d8] sm:$0xff]
        %v318 = vld [vmem:[%s169 + $0x3e0] sm:$0xff]
        %v319 = vld [vmem:[%s169 + $0x3e8] sm:$0xff]
        %v320 = vld [vmem:[%s169 + $0x3f0] sm:$0xff]
        %v321 = vld [vmem:[%s169 + $0x3f8] sm:$0xff]
        %s322 = sld [smem:[#allocation2]]
        %v323 = vstv %s322
        %v324 = vmul.f32 %v194, %v323
        %v325 = vmul.f32 %v195, %v323
        %v326 = vmul.f32 %v196, %v323
        %v327 = vmul.f32 %v197, %v323
        %v328 = vmul.f32 %v198, %v323
        %v329 = vmul.f32 %v199, %v323
        %v330 = vmul.f32 %v200, %v323
        %v331 = vmul.f32 %v201, %v323
        %v332 = vmul.f32 %v202, %v323
        %v333 = vmul.f32 %v203, %v323
        %v334 = vmul.f32 %v204, %v323
        %v335 = vmul.f32 %v205, %v323
        %v336 = vmul.f32 %v206, %v323
        %v337 = vmul.f32 %v207, %v323
        %v338 = vmul.f32 %v208, %v323
        %v339 = vmul.f32 %v209, %v323
        %v340 = vmul.f32 %v210, %v323
        %v341 = vmul.f32 %v211, %v323
        %v342 = vmul.f32 %v212, %v323
        %v343 = vmul.f32 %v213, %v323
        %v344 = vmul.f32 %v214, %v323
        %v345 = vmul.f32 %v215, %v323
        %v346 = vmul.f32 %v216, %v323
        %v347 = vmul.f32 %v217, %v323
        %v348 = vmul.f32 %v218, %v323
        %v349 = vmul.f32 %v219, %v323
        %v350 = vmul.f32 %v220, %v323
        %v351 = vmul.f32 %v221, %v323
        %v352 = vmul.f32 %v222, %v323
        %v353 = vmul.f32 %v223, %v323
        %v354 = vmul.f32 %v224, %v323
        %v355 = vmul.f32 %v225, %v323
        %v356 = vmul.f32 %v226, %v323
        %v357 = vmul.f32 %v227, %v323
        %v358 = vmul.f32 %v228, %v323
        %v359 = vmul.f32 %v229, %v323
        %v360 = vmul.f32 %v230, %v323
        %v361 = vmul.f32 %v231, %v323
        %v362 = vmul.f32 %v232, %v323
        %v363 = vmul.f32 %v233, %v323
        %v364 = vmul.f32 %v234, %v323
        %v365 = vmul.f32 %v235, %v323
        %v366 = vmul.f32 %v236, %v323
        %v367 = vmul.f32 %v237, %v323
        %v368 = vmul.f32 %v238, %v323
        %v369 = vmul.f32 %v239, %v323
        %v370 = vmul.f32 %v240, %v323
        %v371 = vmul.f32 %v241, %v323
        %v372 = vmul.f32 %v242, %v323
        %v373 = vmul.f32 %v243, %v323
        %v374 = vmul.f32 %v244, %v323
        %v375 = vmul.f32 %v245, %v323
        %v376 = vmul.f32 %v246, %v323
        %v377 = vmul.f32 %v247, %v323
        %v378 = vmul.f32 %v248, %v323
        %v379 = vmul.f32 %v249, %v323
        %v380 = vmul.f32 %v250, %v323
        %v381 = vmul.f32 %v251, %v323
        %v382 = vmul.f32 %v252, %v323
        %v383 = vmul.f32 %v253, %v323
        %v384 = vmul.f32 %v254, %v323
        %v385 = vmul.f32 %v255, %v323
        %v386 = vmul.f32 %v256, %v323
        %v387 = vmul.f32 %v257, %v323
        %v388 = vmul.f32 %v258, %v323
        %v389 = vmul.f32 %v259, %v323
        %v390 = vmul.f32 %v260, %v323
        %v391 = vmul.f32 %v261, %v323
        %v392 = vmul.f32 %v262, %v323
        %v393 = vmul.f32 %v263, %v323
        %v394 = vmul.f32 %v264, %v323
        %v395 = vmul.f32 %v265, %v323
        %v396 = vmul.f32 %v266, %v323
        %v397 = vmul.f32 %v267, %v323
        %v398 = vmul.f32 %v268, %v323
        %v399 = vmul.f32 %v269, %v323
        %v400 = vmul.f32 %v270, %v323
        %v401 = vmul.f32 %v271, %v323
        %v402 = vmul.f32 %v272, %v323
        %v403 = vmul.f32 %v273, %v323
        %v404 = vmul.f32 %v274, %v323
        %v405 = vmul.f32 %v275, %v323
        %v406 = vmul.f32 %v276, %v323
        %v407 = vmul.f32 %v277, %v323
        %v408 = vmul.f32 %v278, %v323
        %v409 = vmul.f32 %v279, %v323
        %v410 = vmul.f32 %v280, %v323
        %v411 = vmul.f32 %v281, %v323
        %v412 = vmul.f32 %v282, %v323
        %v413 = vmul.f32 %v283, %v323
        %v414 = vmul.f32 %v284, %v323
        %v415 = vmul.f32 %v285, %v323
        %v416 = vmul.f32 %v286, %v323
        %v417 = vmul.f32 %v287, %v323
        %v418 = vmul.f32 %v288, %v323
        %v419 = vmul.f32 %v289, %v323
        %v420 = vmul.f32 %v290, %v323
        %v421 = vmul.f32 %v291, %v323
        %v422 = vmul.f32 %v292, %v323
        %v423 = vmul.f32 %v293, %v323
        %v424 = vmul.f32 %v294, %v323
        %v425 = vmul.f32 %v295, %v323
        %v426 = vmul.f32 %v296, %v323
        %v427 = vmul.f32 %v297, %v323
        %v428 = vmul.f32 %v298, %v323
        %v429 = vmul.f32 %v299, %v323
        %v430 = vmul.f32 %v300, %v323
        %v431 = vmul.f32 %v301, %v323
        %v432 = vmul.f32 %v302, %v323
        %v433 = vmul.f32 %v303, %v323
        %v434 = vmul.f32 %v304, %v323
        %v435 = vmul.f32 %v305, %v323
        %v436 = vmul.f32 %v306, %v323
        %v437 = vmul.f32 %v307, %v323
        %v438 = vmul.f32 %v308, %v323
        %v439 = vmul.f32 %v309, %v323
        %v440 = vmul.f32 %v310, %v323
        %v441 = vmul.f32 %v311, %v323
        %v442 = vmul.f32 %v312, %v323
        %v443 = vmul.f32 %v313, %v323
        %v444 = vmul.f32 %v314, %v323
        %v445 = vmul.f32 %v315, %v323
        %v446 = vmul.f32 %v316, %v323
        %v447 = vmul.f32 %v317, %v323
        %v448 = vmul.f32 %v318, %v323
        %v449 = vmul.f32 %v319, %v323
        %v450 = vmul.f32 %v320, %v323
        %v451 = vmul.f32 %v321, %v323
        %s452 = sld [smem:[#allocation3]]
        %v453 = vstv %s452
        %v454 = vadd.f32 %v324, %v453
        %v455 = vadd.f32 %v325, %v453
        %v456 = vadd.f32 %v326, %v453
        %v457 = vadd.f32 %v327, %v453
        %v458 = vadd.f32 %v328, %v453
        %v459 = vadd.f32 %v329, %v453
        %v460 = vadd.f32 %v330, %v453
        %v461 = vadd.f32 %v331, %v453
        %v462 = vadd.f32 %v332, %v453
        %v463 = vadd.f32 %v333, %v453
        %v464 = vadd.f32 %v334, %v453
        %v465 = vadd.f32 %v335, %v453
        %v466 = vadd.f32 %v336, %v453
        %v467 = vadd.f32 %v337, %v453
        %v468 = vadd.f32 %v338, %v453
        %v469 = vadd.f32 %v339, %v453
        %v470 = vadd.f32 %v340, %v453
        %v471 = vadd.f32 %v341, %v453
        %v472 = vadd.f32 %v342, %v453
        %v473 = vadd.f32 %v343, %v453
        %v474 = vadd.f32 %v344, %v453
        %v475 = vadd.f32 %v345, %v453
        %v476 = vadd.f32 %v346, %v453
        %v477 = vadd.f32 %v347, %v453
        %v478 = vadd.f32 %v348, %v453
        %v479 = vadd.f32 %v349, %v453
        %v480 = vadd.f32 %v350, %v453
        %v481 = vadd.f32 %v351, %v453
        %v482 = vadd.f32 %v352, %v453
        %v483 = vadd.f32 %v353, %v453
        %v484 = vadd.f32 %v354, %v453
        %v485 = vadd.f32 %v355, %v453
        %v486 = vadd.f32 %v356, %v453
        %v487 = vadd.f32 %v357, %v453
        %v488 = vadd.f32 %v358, %v453
        %v489 = vadd.f32 %v359, %v453
        %v490 = vadd.f32 %v360, %v453
        %v491 = vadd.f32 %v361, %v453
        %v492 = vadd.f32 %v362, %v453
        %v493 = vadd.f32 %v363, %v453
        %v494 = vadd.f32 %v364, %v453
        %v495 = vadd.f32 %v365, %v453
        %v496 = vadd.f32 %v366, %v453
        %v497 = vadd.f32 %v367, %v453
        %v498 = vadd.f32 %v368, %v453
        %v499 = vadd.f32 %v369, %v453
        %v500 = vadd.f32 %v370, %v453
        %v501 = vadd.f32 %v371, %v453
        %v502 = vadd.f32 %v372, %v453
        %v503 = vadd.f32 %v373, %v453
        %v504 = vadd.f32 %v374, %v453
        %v505 = vadd.f32 %v375, %v453
        %v506 = vadd.f32 %v376, %v453
        %v507 = vadd.f32 %v377, %v453
        %v508 = vadd.f32 %v378, %v453
        %v509 = vadd.f32 %v379, %v453
        %v510 = vadd.f32 %v380, %v453
        %v511 = vadd.f32 %v381, %v453
        %v512 = vadd.f32 %v382, %v453
        %v513 = vadd.f32 %v383, %v453
        %v514 = vadd.f32 %v384, %v453
        %v515 = vadd.f32 %v385, %v453
        %v516 = vadd.f32 %v386, %v453
        %v517 = vadd.f32 %v387, %v453
        %v518 = vadd.f32 %v388, %v453
        %v519 = vadd.f32 %v389, %v453
        %v520 = vadd.f32 %v390, %v453
        %v521 = vadd.f32 %v391, %v453
        %v522 = vadd.f32 %v392, %v453
        %v523 = vadd.f32 %v393, %v453
        %v524 = vadd.f32 %v394, %v453
        %v525 = vadd.f32 %v395, %v453
        %v526 = vadd.f32 %v396, %v453
        %v527 = vadd.f32 %v397, %v453
        %v528 = vadd.f32 %v398, %v453
        %v529 = vadd.f32 %v399, %v453
        %v530 = vadd.f32 %v400, %v453
        %v531 = vadd.f32 %v401, %v453
        %v532 = vadd.f32 %v402, %v453
        %v533 = vadd.f32 %v403, %v453
        %v534 = vadd.f32 %v404, %v453
        %v535 = vadd.f32 %v405, %v453
        %v536 = vadd.f32 %v406, %v453
        %v537 = vadd.f32 %v407, %v453
        %v538 = vadd.f32 %v408, %v453
        %v539 = vadd.f32 %v409, %v453
        %v540 = vadd.f32 %v410, %v453
        %v541 = vadd.f32 %v411, %v453
        %v542 = vadd.f32 %v412, %v453
        %v543 = vadd.f32 %v413, %v453
        %v544 = vadd.f32 %v414, %v453
        %v545 = vadd.f32 %v415, %v453
        %v546 = vadd.f32 %v416, %v453
        %v547 = vadd.f32 %v417, %v453
        %v548 = vadd.f32 %v418, %v453
        %v549 = vadd.f32 %v419, %v453
        %v550 = vadd.f32 %v420, %v453
        %v551 = vadd.f32 %v421, %v453
        %v552 = vadd.f32 %v422, %v453
        %v553 = vadd.f32 %v423, %v453
        %v554 = vadd.f32 %v424, %v453
        %v555 = vadd.f32 %v425, %v453
        %v556 = vadd.f32 %v426, %v453
        %v557 = vadd.f32 %v427, %v453
        %v558 = vadd.f32 %v428, %v453
        %v559 = vadd.f32 %v429, %v453
        %v560 = vadd.f32 %v430, %v453
        %v561 = vadd.f32 %v431, %v453
        %v562 = vadd.f32 %v432, %v453
        %v563 = vadd.f32 %v433, %v453
        %v564 = vadd.f32 %v434, %v453
        %v565 = vadd.f32 %v435, %v453
        %v566 = vadd.f32 %v436, %v453
        %v567 = vadd.f32 %v437, %v453
        %v568 = vadd.f32 %v438, %v453
        %v569 = vadd.f32 %v439, %v453
        %v570 = vadd.f32 %v440, %v453
        %v571 = vadd.f32 %v441, %v453
        %v572 = vadd.f32 %v442, %v453
        %v573 = vadd.f32 %v443, %v453
        %v574 = vadd.f32 %v444, %v453
        %v575 = vadd.f32 %v445, %v453
        %v576 = vadd.f32 %v446, %v453
        %v577 = vadd.f32 %v447, %v453
        %v578 = vadd.f32 %v448, %v453
        %v579 = vadd.f32 %v449, %v453
        %v580 = vadd.f32 %v450, %v453
        %v581 = vadd.f32 %v451, %v453
        %582 = vst [vmem:[%s191] sm:$0xff] %v454
        %583 = vst [vmem:[%s191 + $0x8] sm:$0xff] %v455
        %584 = vst [vmem:[%s191 + $0x10] sm:$0xff] %v456
        %585 = vst [vmem:[%s191 + $0x18] sm:$0xff] %v457
        %586 = vst [vmem:[%s191 + $0x20] sm:$0xff] %v458
        %587 = vst [vmem:[%s191 + $0x28] sm:$0xff] %v459
        %588 = vst [vmem:[%s191 + $0x30] sm:$0xff] %v460
        %589 = vst [vmem:[%s191 + $0x38] sm:$0xff] %v461
        %590 = vst [vmem:[%s191 + $0x40] sm:$0xff] %v462
        %591 = vst [vmem:[%s191 + $0x48] sm:$0xff] %v463
        %592 = vst [vmem:[%s191 + $0x50] sm:$0xff] %v464
        %593 = vst [vmem:[%s191 + $0x58] sm:$0xff] %v465
        %594 = vst [vmem:[%s191 + $0x60] sm:$0xff] %v466
        %595 = vst [vmem:[%s191 + $0x68] sm:$0xff] %v467
        %596 = vst [vmem:[%s191 + $0x70] sm:$0xff] %v468
        %597 = vst [vmem:[%s191 + $0x78] sm:$0xff] %v469
        %598 = vst [vmem:[%s191 + $0x80] sm:$0xff] %v470
        %599 = vst [vmem:[%s191 + $0x88] sm:$0xff] %v471
        %600 = vst [vmem:[%s191 + $0x90] sm:$0xff] %v472
        %601 = vst [vmem:[%s191 + $0x98] sm:$0xff] %v473
        %602 = vst [vmem:[%s191 + $0xa0] sm:$0xff] %v474
        %603 = vst [vmem:[%s191 + $0xa8] sm:$0xff] %v475
        %604 = vst [vmem:[%s191 + $0xb0] sm:$0xff] %v476
        %605 = vst [vmem:[%s191 + $0xb8] sm:$0xff] %v477
        %606 = vst [vmem:[%s191 + $0xc0] sm:$0xff] %v478
        %607 = vst [vmem:[%s191 + $0xc8] sm:$0xff] %v479
        %608 = vst [vmem:[%s191 + $0xd0] sm:$0xff] %v480
        %609 = vst [vmem:[%s191 + $0xd8] sm:$0xff] %v481
        %610 = vst [vmem:[%s191 + $0xe0] sm:$0xff] %v482
        %611 = vst [vmem:[%s191 + $0xe8] sm:$0xff] %v483
        %612 = vst [vmem:[%s191 + $0xf0] sm:$0xff] %v484
        %613 = vst [vmem:[%s191 + $0xf8] sm:$0xff] %v485
        %614 = vst [vmem:[%s191 + $0x100] sm:$0xff] %v486
        %615 = vst [vmem:[%s191 + $0x108] sm:$0xff] %v487
        %616 = vst [vmem:[%s191 + $0x110] sm:$0xff] %v488
        %617 = vst [vmem:[%s191 + $0x118] sm:$0xff] %v489
        %618 = vst [vmem:[%s191 + $0x120] sm:$0xff] %v490
        %619 = vst [vmem:[%s191 + $0x128] sm:$0xff] %v491
        %620 = vst [vmem:[%s191 + $0x130] sm:$0xff] %v492
        %621 = vst [vmem:[%s191 + $0x138] sm:$0xff] %v493
        %622 = vst [vmem:[%s191 + $0x140] sm:$0xff] %v494
        %623 = vst [vmem:[%s191 + $0x148] sm:$0xff] %v495
        %624 = vst [vmem:[%s191 + $0x150] sm:$0xff] %v496
        %625 = vst [vmem:[%s191 + $0x158] sm:$0xff] %v497
        %626 = vst [vmem:[%s191 + $0x160] sm:$0xff] %v498
        %627 = vst [vmem:[%s191 + $0x168] sm:$0xff] %v499
        %628 = vst [vmem:[%s191 + $0x170] sm:$0xff] %v500
        %629 = vst [vmem:[%s191 + $0x178] sm:$0xff] %v501
        %630 = vst [vmem:[%s191 + $0x180] sm:$0xff] %v502
        %631 = vst [vmem:[%s191 + $0x188] sm:$0xff] %v503
        %632 = vst [vmem:[%s191 + $0x190] sm:$0xff] %v504
        %633 = vst [vmem:[%s191 + $0x198] sm:$0xff] %v505
        %634 = vst [vmem:[%s191 + $0x1a0] sm:$0xff] %v506
        %635 = vst [vmem:[%s191 + $0x1a8] sm:$0xff] %v507
        %636 = vst [vmem:[%s191 + $0x1b0] sm:$0xff] %v508
        %637 = vst [vmem:[%s191 + $0x1b8] sm:$0xff] %v509
        %638 = vst [vmem:[%s191 + $0x1c0] sm:$0xff] %v510
        %639 = vst [vmem:[%s191 + $0x1c8] sm:$0xff] %v511
        %640 = vst [vmem:[%s191 + $0x1d0] sm:$0xff] %v512
        %641 = vst [vmem:[%s191 + $0x1d8] sm:$0xff] %v513
        %642 = vst [vmem:[%s191 + $0x1e0] sm:$0xff] %v514
        %643 = vst [vmem:[%s191 + $0x1e8] sm:$0xff] %v515
        %644 = vst [vmem:[%s191 + $0x1f0] sm:$0xff] %v516
        %645 = vst [vmem:[%s191 + $0x1f8] sm:$0xff] %v517
        %646 = vst [vmem:[%s191 + $0x200] sm:$0xff] %v518
        %647 = vst [vmem:[%s191 + $0x208] sm:$0xff] %v519
        %648 = vst [vmem:[%s191 + $0x210] sm:$0xff] %v520
        %649 = vst [vmem:[%s191 + $0x218] sm:$0xff] %v521
        %650 = vst [vmem:[%s191 + $0x220] sm:$0xff] %v522
        %651 = vst [vmem:[%s191 + $0x228] sm:$0xff] %v523
        %652 = vst [vmem:[%s191 + $0x230] sm:$0xff] %v524
        %653 = vst [vmem:[%s191 + $0x238] sm:$0xff] %v525
        %654 = vst [vmem:[%s191 + $0x240] sm:$0xff] %v526
        %655 = vst [vmem:[%s191 + $0x248] sm:$0xff] %v527
        %656 = vst [vmem:[%s191 + $0x250] sm:$0xff] %v528
        %657 = vst [vmem:[%s191 + $0x258] sm:$0xff] %v529
        %658 = vst [vmem:[%s191 + $0x260] sm:$0xff] %v530
        %659 = vst [vmem:[%s191 + $0x268] sm:$0xff] %v531
        %660 = vst [vmem:[%s191 + $0x270] sm:$0xff] %v532
        %661 = vst [vmem:[%s191 + $0x278] sm:$0xff] %v533
        %662 = vst [vmem:[%s191 + $0x280] sm:$0xff] %v534
        %663 = vst [vmem:[%s191 + $0x288] sm:$0xff] %v535
        %664 = vst [vmem:[%s191 + $0x290] sm:$0xff] %v536
        %665 = vst [vmem:[%s191 + $0x298] sm:$0xff] %v537
        %666 = vst [vmem:[%s191 + $0x2a0] sm:$0xff] %v538
        %667 = vst [vmem:[%s191 + $0x2a8] sm:$0xff] %v539
        %668 = vst [vmem:[%s191 + $0x2b0] sm:$0xff] %v540
        %669 = vst [vmem:[%s191 + $0x2b8] sm:$0xff] %v541
        %670 = vst [vmem:[%s191 + $0x2c0] sm:$0xff] %v542
        %671 = vst [vmem:[%s191 + $0x2c8] sm:$0xff] %v543
        %672 = vst [vmem:[%s191 + $0x2d0] sm:$0xff] %v544
        %673 = vst [vmem:[%s191 + $0x2d8] sm:$0xff] %v545
        %674 = vst [vmem:[%s191 + $0x2e0] sm:$0xff] %v546
        %675 = vst [vmem:[%s191 + $0x2e8] sm:$0xff] %v547
        %676 = vst [vmem:[%s191 + $0x2f0] sm:$0xff] %v548
        %677 = vst [vmem:[%s191 + $0x2f8] sm:$0xff] %v549
        %678 = vst [vmem:[%s191 + $0x300] sm:$0xff] %v550
        %679 = vst [vmem:[%s191 + $0x308] sm:$0xff] %v551
        %680 = vst [vmem:[%s191 + $0x310] sm:$0xff] %v552
        %681 = vst [vmem:[%s191 + $0x318] sm:$0xff] %v553
        %682 = vst [vmem:[%s191 + $0x320] sm:$0xff] %v554
        %683 = vst [vmem:[%s191 + $0x328] sm:$0xff] %v555
        %684 = vst [vmem:[%s191 + $0x330] sm:$0xff] %v556
        %685 = vst [vmem:[%s191 + $0x338] sm:$0xff] %v557
        %686 = vst [vmem:[%s191 + $0x340] sm:$0xff] %v558
        %687 = vst [vmem:[%s191 + $0x348] sm:$0xff] %v559
        %688 = vst [vmem:[%s191 + $0x350] sm:$0xff] %v560
        %689 = vst [vmem:[%s191 + $0x358] sm:$0xff] %v561
        %690 = vst [vmem:[%s191 + $0x360] sm:$0xff] %v562
        %691 = vst [vmem:[%s191 + $0x368] sm:$0xff] %v563
        %692 = vst [vmem:[%s191 + $0x370] sm:$0xff] %v564
        %693 = vst [vmem:[%s191 + $0x378] sm:$0xff] %v565
        %694 = vst [vmem:[%s191 + $0x380] sm:$0xff] %v566
        %695 = vst [vmem:[%s191 + $0x388] sm:$0xff] %v567
        %696 = vst [vmem:[%s191 + $0x390] sm:$0xff] %v568
        %697 = vst [vmem:[%s191 + $0x398] sm:$0xff] %v569
        %698 = vst [vmem:[%s191 + $0x3a0] sm:$0xff] %v570
        %699 = vst [vmem:[%s191 + $0x3a8] sm:$0xff] %v571
        %700 = vst [vmem:[%s191 + $0x3b0] sm:$0xff] %v572
        %701 = vst [vmem:[%s191 + $0x3b8] sm:$0xff] %v573
        %702 = vst [vmem:[%s191 + $0x3c0] sm:$0xff] %v574
        %703 = vst [vmem:[%s191 + $0x3c8] sm:$0xff] %v575
        %704 = vst [vmem:[%s191 + $0x3d0] sm:$0xff] %v576
        %705 = vst [vmem:[%s191 + $0x3d8] sm:$0xff] %v577
        %706 = vst [vmem:[%s191 + $0x3e0] sm:$0xff] %v578
        %707 = vst [vmem:[%s191 + $0x3e8] sm:$0xff] %v579
        %708 = vst [vmem:[%s191 + $0x3f0] sm:$0xff] %v580
        %709 = vst [vmem:[%s191 + $0x3f8] sm:$0xff] %v581
        %s710 = sand.u32 %s98, 1
        %s711 = scalar_lea.sflag [#allocation6], %s710
        %s712 = sand.u32 %s98, 1
        %s713 = smul.addr %s712, 1024
        %s714 = scalar_lea.vmem [#allocation7], %s713
        // Predicated region
        $region37: #{tpu_custom_call.1} parent=31 // pred_check
          %p715 = pneg %p108
        $region38: #{tpu_custom_call.1} parent=31 // pred_check_branch
          %717 = sbr.rel (%p715) target = $region40
        $region39: #{tpu_custom_call.1} parent=31 // pred_region
          %s718 = smul.u32 64, %s22
          %s720 = ssub.s32 16384, 16384
          %721 = vsyncadd %s711, %s720
          %s722 = smul.addr %s718, 2
          %s723 = smul.addr %s722, 128
          %s724 = scalar_lea.hbm %s3, %s723
          %s725 = sshll.u32 %s714, 4
          %s726 = int_to_ptr.vmem [resolvable:$true] %s725
          %731 = dma.vmem_to_hbm [thread:$0]  %s726, 16384, %s724, %s711, 256, 256, 16
        $region40: #{tpu_custom_call.1} parent=31 // pred_fallthru
          _
      $region32: #{tpu_custom_call.1} parent=5 // pred_fallthru
        _
      %p732 = scmp.le.s32.totalorder 2, %s17
      // Predicated region
      $region41: #{tpu_custom_call.1} parent=5 // pred_check
        %p733 = pneg %p732
      $region42: #{tpu_custom_call.1} parent=5 // pred_check_branch
        %735 = sbr.rel (%p733) target = $region44
      $region43: #{tpu_custom_call.1} parent=5 // pred_region
        %s736 = ssub.s32 %s17, 2
        // Predicated region
        $region45: #{tpu_custom_call.1} parent=43 // pred_check
          %p737 = pneg %p114
        $region46: #{tpu_custom_call.1} parent=43 // pred_check_branch
          %739 = sbr.rel (%p737) target = $region48
        $region47: #{tpu_custom_call.1} parent=43 // pred_region
          %s740 = sand.u32 %s99, 1
          %s741 = scalar_lea.sflag [#allocation6], %s740
          %s742 = sand.u32 %s99, 1
          %s743 = smul.addr %s742, 1024
          %s744 = scalar_lea.vmem [#allocation7], %s743
          %745 = dma.done %s741, 16384
        $region48: #{tpu_custom_call.1} parent=43 // pred_fallthru
          _
      $region44: #{tpu_custom_call.1} parent=5 // pred_fallthru
        _
    $region6: #{tpu_custom_call.1} parent=1 // loop_footer
      %s21 = sadd.s32 1, %s17
    $region7: #{tpu_custom_call.1} parent=1 // loop_footer_branch
      %16 = sbr.rel target = $region3
    $region8: #{tpu_custom_call.1} parent=1 // loop_exit
      _
    %746 = vsyncpa [#allocation5], 1
    %s747 = scalar_lea.sflag [#allocation5], 1
    %748 = vsyncpa %s747, 1
    %749 = vsyncpa [#allocation6], 1
    %s750 = scalar_lea.sflag [#allocation6], 1
    %751 = vsyncpa %s750, 1

</llo_original>
